<compile_context>
chip_gen: v7x
topology: tpu7x:2x2x1
jax: 0.10.0
libtpu: 0.0.40
codegen_flags: <defaults>
</compile_context>

<pallas_src>
import jax
import jax.numpy as jnp
from jax import lax
from jax.experimental import pallas as pl
from jax.experimental.pallas import tpu as pltpu

BN_EPS = 1e-5


def _make_edge_kernel(TB, C, H, W):
    HW = H * W
    N = C * HW
    w_pow2 = (W & (W - 1)) == 0
    h_pow2 = (H & (H - 1)) == 0
    log2_w = W.bit_length() - 1

    def kernel(x_ref, wh_ref, wv_ref, shift_ref, o_ref):
        # x_ref : (TB, C*HW)  lane-packed input tile (VMEM); channel c lives in the
        #         HW-lane slice [c*HW, (c+1)*HW) (HW is a multiple of 128).
        # wh_ref/wv_ref : (C, C)  BN-folded 1x1 weights (SMEM scalars)
        # shift_ref     : (C,)    folded conv-bias + BN shift (SMEM scalars)
        # o_ref : (TB, C*HW)
        x = x_ref[...]

        # Boundary masks (column within a row, row within an image). Power-of-two
        # sizes use bit ops instead of mod/div.
        lane = lax.broadcasted_iota(jnp.int32, (1, N), 1)
        if w_pow2:
            col = lane & (W - 1)
            row_all = lane >> log2_w
        else:
            col = lane % W
            row_all = lane // W
        row = (row_all & (H - 1)) if h_pow2 else (row_all % H)
        not_first_col = col != 0
        not_last_col = col != (W - 1)
        not_first_row = row != 0
        not_last_row = row != (H - 1)

        # Zero-padded neighbour fetches: XLU lane rotations (pltpu.roll, jnp.roll
        # semantics: result[l] = x[l - shift]) with wrapped lanes masked to zero.
        x_lft = jnp.where(not_first_col, pltpu.roll(x, 1, 1), 0.0)      # x[., j-1]
        x_rgt = jnp.where(not_last_col, pltpu.roll(x, N - 1, 1), 0.0)   # x[., j+1]

        # Separable Sobel, horizontal pass.
        dh = x_rgt - x_lft               # [-1, 0, 1]
        sh = x_lft + 2.0 * x + x_rgt     # [ 1, 2, 1]

        # Vertical pass: +-W lane rotations == +-1 image row (zero row padding).
        dh_up = jnp.where(not_first_row, pltpu.roll(dh, W, 1), 0.0)
        dh_dn = jnp.where(not_last_row, pltpu.roll(dh, N - W, 1), 0.0)
        sh_up = jnp.where(not_first_row, pltpu.roll(sh, W, 1), 0.0)
        sh_dn = jnp.where(not_last_row, pltpu.roll(sh, N - W, 1), 0.0)
        eh = dh_up + 2.0 * dh + dh_dn    # Sobel-h
        ev = sh_dn - sh_up               # Sobel-v

        # 1x1 channel mix (BN scale folded into wh/wv) + shift + ReLU.
        # Small C: unrolled VPU broadcast-FMA with SMEM scalar weights; each output
        # channel is one aligned HW-lane store.
        for o in range(C):
            acc = None
            for c in range(C):
                sl = slice(c * HW, (c + 1) * HW)
                term = wh_ref[o, c] * eh[:, sl] + wv_ref[o, c] * ev[:, sl]
                acc = term if acc is None else acc + term
            o_ref[:, o * HW:(o + 1) * HW] = jnp.maximum(acc + shift_ref[o], 0.0)

    return kernel


def _pick_batch_block(B, C, HW, target_bytes=4 << 20):
    """Batch block whose (in+out) f32 tile is near target_bytes, divides B, and
    keeps the block shape legal (second-to-last dim == B or a multiple of 8)."""
    per_image = 2 * C * HW * 4  # input + output tile, f32
    total = B * per_image
    if total <= target_bytes:
        # Split into 2 grid steps (v7x: 2 TensorCores) only if each half still
        # amortizes per-step overhead and stays a legal block shape.
        if B % 2 == 0 and total // 2 >= (512 << 10) and (B // 2) % 8 == 0:
            return B // 2
        return B
    tb_cap = max(1, target_bytes // per_image)
    for tb in range(min(tb_cap, B), 0, -1):
        if B % tb == 0 and tb % 8 == 0:
            return tb
    return B  # fallback: single step with the whole batch


def edge_detection_forward(x, w1, b1, gamma, beta, running_mean, running_var):
    """x: (B, C, H, W) f32; w1: (C, 2C) 1x1-conv weight; b1: (C,) conv bias;
    gamma/beta/running_mean/running_var: (C,) BatchNorm params (inference)."""
    B, C, H, W = x.shape
    HW = H * W
    N = C * HW

    # Fold BN (inference) into the 1x1 conv: scale into weights, shift kept.
    scale = gamma / jnp.sqrt(running_var + BN_EPS)            # (C,)
    shift = (b1 - running_mean) * scale + beta                # (C,)
    w_h = w1[:, :C] * scale[:, None]                          # mixes edge_h channels
    w_v = w1[:, C:] * scale[:, None]                          # mixes edge_v channels

    x2 = x.reshape(B, N)   # lane-packed, contiguous => free reshape

    TB = _pick_batch_block(B, C, HW)
    grid = (B // TB,)
    kernel = _make_edge_kernel(TB, C, H, W)

    out = pl.pallas_call(
        kernel,
        out_shape=jax.ShapeDtypeStruct((B, N), jnp.float32),
        grid_spec=pltpu.PrefetchScalarGridSpec(
            num_scalar_prefetch=0,
            grid=grid,
            in_specs=[
                pl.BlockSpec((TB, N), lambda i: (i, 0)),
                pl.BlockSpec(memory_space=pltpu.MemorySpace.SMEM),   # w_h  (C, C)
                pl.BlockSpec(memory_space=pltpu.MemorySpace.SMEM),   # w_v  (C, C)
                pl.BlockSpec(memory_space=pltpu.MemorySpace.SMEM),   # shift (C,)
            ],
            out_specs=pl.BlockSpec((TB, N), lambda i: (i, 0)),
        ),
        compiler_params=pltpu.CompilerParams(
            dimension_semantics=("parallel",),
            vmem_limit_bytes=48 * 1024 * 1024),
    )(x2, w_h, w_v, shift)
    return out.reshape(B, C, H, W)


def _reference(x, w1, b1, gamma, beta, running_mean, running_var):
    """Pure-JAX reference using lax convolutions (NCHW), PyTorch semantics."""
    B, C, H, W = x.shape
    sobel_h = jnp.array([[-1., 0., 1.], [-2., 0., 2.], [-1., 0., 1.]], jnp.float32)
    sobel_v = jnp.array([[-1., -2., -1.], [0., 0., 0.], [1., 2., 1.]], jnp.float32)
    wh = jnp.broadcast_to(sobel_h, (C, 1, 3, 3))
    wv = jnp.broadcast_to(sobel_v, (C, 1, 3, 3))
    dn = lax.conv_dimension_numbers(x.shape, wh.shape, ("NCHW", "OIHW", "NCHW"))
    edge_h = lax.conv_general_dilated(x, wh, (1, 1), ((1, 1), (1, 1)),
                                      dimension_numbers=dn, feature_group_count=C)
    edge_v = lax.conv_general_dilated(x, wv, (1, 1), ((1, 1), (1, 1)),
                                      dimension_numbers=dn, feature_group_count=C)
    cat = jnp.concatenate([edge_h, edge_v], axis=1)            # (B, 2C, H, W)
    y = jnp.einsum("oc,bchw->bohw", w1, cat) + b1[None, :, None, None]
    y = (y - running_mean[None, :, None, None]) / jnp.sqrt(
        running_var[None, :, None, None] + BN_EPS)
    y = y * gamma[None, :, None, None] + beta[None, :, None, None]
    return jnp.maximum(y, 0.0)


if __name__ == "__main__":
    B, C, H, W = 2, 4, 16, 16
    key = jax.random.PRNGKey(0)
    k_x, k_w, k_b, k_g, k_bt = jax.random.split(key, 5)

    x = jax.random.normal(k_x, (B, C, H, W), dtype=jnp.float32)

    # edge_conv = Conv2d(2C, C, 1) + BatchNorm2d(C); deterministic synthetic init.
    w1 = jax.random.normal(k_w, (C, 2 * C), dtype=jnp.float32) * 0.1
    b1 = jax.random.normal(k_b, (C,), dtype=jnp.float32) * 0.1
    gamma = 1.0 + 0.1 * jax.random.normal(k_g, (C,), dtype=jnp.float32)
    beta = 0.1 * jax.random.normal(k_bt, (C,), dtype=jnp.float32)
    running_mean = jnp.zeros((C,), jnp.float32)   # fresh PyTorch BN defaults
    running_var = jnp.ones((C,), jnp.float32)

    out = edge_detection_forward(x, w1, b1, gamma, beta, running_mean, running_var)
    out = jax.block_until_ready(out)

    ref = _reference(x, w1, b1, gamma, beta, running_mean, running_var)
    assert out.shape == (B, C, H, W)
    err = jnp.max(jnp.abs(out - ref))
    assert err < 1e-4, f"mismatch vs reference: {err}"

    print("KERNEL_OK")
</pallas_src>

<mosaic_0001>
module attributes {stable_mosaic.version = 11 : i64} {
  func.func @kernel(%arg0: i32, %arg1: memref<2x1024xf32, #tpu.memory_space<vmem>>, %arg2: memref<4x4xf32, #tpu.memory_space<smem>>, %arg3: memref<4x4xf32, #tpu.memory_space<smem>>, %arg4: memref<4xf32, #tpu.memory_space<smem>>, %arg5: memref<2x1024xf32, #tpu.memory_space<vmem>>) attributes {dimension_semantics = [#tpu.dimension_semantics<parallel>], iteration_bounds = array<i64: 1>, scalar_prefetch = 0 : i64, scratch_operands = 0 : i64, tpu.core_type = #tpu.core_type<tc>, window_params = [{transform_indices = @transform_0, window_bounds = array<i64: 2, 1024>}, {transform_indices = @transform_1, window_bounds = array<i64: 4, 4>}, {transform_indices = @transform_2, window_bounds = array<i64: 4, 4>}, {transform_indices = @transform_3, window_bounds = array<i64: 4>}, {transform_indices = @transform_4, window_bounds = array<i64: 2, 1024>}]} {
    %c0 = arith.constant 0 : index
    %c0_0 = arith.constant 0 : index
    %0 = vector.load %arg1[%c0, %c0_0] : memref<2x1024xf32, #tpu.memory_space<vmem>>, vector<2x1024xf32>
    %1 = tpu.iota {dimensions = array<i32: 1>} : vector<1x1024xi32>
    %c15_i32 = arith.constant 15 : i32
    %2 = vector.broadcast %c15_i32 : i32 to vector<1x1024xi32>
    %3 = arith.andi %1, %2 : vector<1x1024xi32>
    %c4_i32 = arith.constant 4 : i32
    %4 = vector.broadcast %c4_i32 : i32 to vector<1x1024xi32>
    %5 = arith.shrsi %1, %4 : vector<1x1024xi32>
    %c15_i32_1 = arith.constant 15 : i32
    %6 = vector.broadcast %c15_i32_1 : i32 to vector<1x1024xi32>
    %7 = arith.andi %5, %6 : vector<1x1024xi32>
    %c0_i32 = arith.constant 0 : i32
    %8 = vector.broadcast %c0_i32 : i32 to vector<1x1024xi32>
    %9 = arith.cmpi ne, %3, %8 : vector<1x1024xi32>
    %c15_i32_2 = arith.constant 15 : i32
    %10 = vector.broadcast %c15_i32_2 : i32 to vector<1x1024xi32>
    %11 = arith.cmpi ne, %3, %10 : vector<1x1024xi32>
    %c0_i32_3 = arith.constant 0 : i32
    %12 = vector.broadcast %c0_i32_3 : i32 to vector<1x1024xi32>
    %13 = arith.cmpi ne, %7, %12 : vector<1x1024xi32>
    %c15_i32_4 = arith.constant 15 : i32
    %14 = vector.broadcast %c15_i32_4 : i32 to vector<1x1024xi32>
    %15 = arith.cmpi ne, %7, %14 : vector<1x1024xi32>
    %c1_i32 = arith.constant 1 : i32
    %16 = tpu.dynamic_rotate %0 by %c1_i32 dim 1 : vector<2x1024xf32>, i32 -> vector<2x1024xf32>
    %cst = arith.constant 0.000000e+00 : f32
    %17 = vector.shape_cast %9 : vector<1x1024xi1> to vector<1x1024xi1>
    %18 = vector.broadcast %17 : vector<1x1024xi1> to vector<2x1024xi1>
    %19 = vector.broadcast %cst : f32 to vector<2x1024xf32>
    %20 = arith.select %18, %16, %19 : vector<2x1024xi1>, vector<2x1024xf32>
    %c1023_i32 = arith.constant 1023 : i32
    %21 = tpu.dynamic_rotate %0 by %c1023_i32 dim 1 : vector<2x1024xf32>, i32 -> vector<2x1024xf32>
    %cst_5 = arith.constant 0.000000e+00 : f32
    %22 = vector.shape_cast %11 : vector<1x1024xi1> to vector<1x1024xi1>
    %23 = vector.broadcast %22 : vector<1x1024xi1> to vector<2x1024xi1>
    %24 = vector.broadcast %cst_5 : f32 to vector<2x1024xf32>
    %25 = arith.select %23, %21, %24 : vector<2x1024xi1>, vector<2x1024xf32>
    %26 = arith.subf %25, %20 : vector<2x1024xf32>
    %cst_6 = arith.constant 2.000000e+00 : f32
    %27 = vector.broadcast %cst_6 : f32 to vector<2x1024xf32>
    %28 = arith.mulf %27, %0 : vector<2x1024xf32>
    %29 = arith.addf %20, %28 : vector<2x1024xf32>
    %30 = arith.addf %29, %25 : vector<2x1024xf32>
    %c16_i32 = arith.constant 16 : i32
    %31 = tpu.dynamic_rotate %26 by %c16_i32 dim 1 : vector<2x1024xf32>, i32 -> vector<2x1024xf32>
    %cst_7 = arith.constant 0.000000e+00 : f32
    %32 = vector.shape_cast %13 : vector<1x1024xi1> to vector<1x1024xi1>
    %33 = vector.broadcast %32 : vector<1x1024xi1> to vector<2x1024xi1>
    %34 = vector.broadcast %cst_7 : f32 to vector<2x1024xf32>
    %35 = arith.select %33, %31, %34 : vector<2x1024xi1>, vector<2x1024xf32>
    %c1008_i32 = arith.constant 1008 : i32
    %36 = tpu.dynamic_rotate %26 by %c1008_i32 dim 1 : vector<2x1024xf32>, i32 -> vector<2x1024xf32>
    %cst_8 = arith.constant 0.000000e+00 : f32
    %37 = vector.shape_cast %15 : vector<1x1024xi1> to vector<1x1024xi1>
    %38 = vector.broadcast %37 : vector<1x1024xi1> to vector<2x1024xi1>
    %39 = vector.broadcast %cst_8 : f32 to vector<2x1024xf32>
    %40 = arith.select %38, %36, %39 : vector<2x1024xi1>, vector<2x1024xf32>
    %c16_i32_9 = arith.constant 16 : i32
    %41 = tpu.dynamic_rotate %30 by %c16_i32_9 dim 1 : vector<2x1024xf32>, i32 -> vector<2x1024xf32>
    %cst_10 = arith.constant 0.000000e+00 : f32
    %42 = vector.shape_cast %13 : vector<1x1024xi1> to vector<1x1024xi1>
    %43 = vector.broadcast %42 : vector<1x1024xi1> to vector<2x1024xi1>
    %44 = vector.broadcast %cst_10 : f32 to vector<2x1024xf32>
    %45 = arith.select %43, %41, %44 : vector<2x1024xi1>, vector<2x1024xf32>
    %c1008_i32_11 = arith.constant 1008 : i32
    %46 = tpu.dynamic_rotate %30 by %c1008_i32_11 dim 1 : vector<2x1024xf32>, i32 -> vector<2x1024xf32>
    %cst_12 = arith.constant 0.000000e+00 : f32
    %47 = vector.shape_cast %15 : vector<1x1024xi1> to vector<1x1024xi1>
    %48 = vector.broadcast %47 : vector<1x1024xi1> to vector<2x1024xi1>
    %49 = vector.broadcast %cst_12 : f32 to vector<2x1024xf32>
    %50 = arith.select %48, %46, %49 : vector<2x1024xi1>, vector<2x1024xf32>
    %cst_13 = arith.constant 2.000000e+00 : f32
    %51 = vector.broadcast %cst_13 : f32 to vector<2x1024xf32>
    %52 = arith.mulf %51, %26 : vector<2x1024xf32>
    %53 = arith.addf %35, %52 : vector<2x1024xf32>
    %54 = arith.addf %53, %40 : vector<2x1024xf32>
    %55 = arith.subf %50, %45 : vector<2x1024xf32>
    %c0_14 = arith.constant 0 : index
    %c0_15 = arith.constant 0 : index
    %56 = memref.load %arg2[%c0_14, %c0_15] : memref<4x4xf32, #tpu.memory_space<smem>>
    %57 = vector.extract_strided_slice %54 {offsets = [0, 0], sizes = [2, 256], strides = [1, 1]} : vector<2x1024xf32> to vector<2x256xf32>
    %58 = vector.broadcast %56 : f32 to vector<2x256xf32>
    %59 = arith.mulf %58, %57 : vector<2x256xf32>
    %c0_16 = arith.constant 0 : index
    %c0_17 = arith.constant 0 : index
    %60 = memref.load %arg3[%c0_16, %c0_17] : memref<4x4xf32, #tpu.memory_space<smem>>
    %61 = vector.extract_strided_slice %55 {offsets = [0, 0], sizes = [2, 256], strides = [1, 1]} : vector<2x1024xf32> to vector<2x256xf32>
    %62 = vector.broadcast %60 : f32 to vector<2x256xf32>
    %63 = arith.mulf %62, %61 : vector<2x256xf32>
    %64 = arith.addf %59, %63 : vector<2x256xf32>
    %c0_18 = arith.constant 0 : index
    %c1 = arith.constant 1 : index
    %65 = memref.load %arg2[%c0_18, %c1] : memref<4x4xf32, #tpu.memory_space<smem>>
    %66 = vector.extract_strided_slice %54 {offsets = [0, 256], sizes = [2, 256], strides = [1, 1]} : vector<2x1024xf32> to vector<2x256xf32>
    %67 = vector.broadcast %65 : f32 to vector<2x256xf32>
    %68 = arith.mulf %67, %66 : vector<2x256xf32>
    %c0_19 = arith.constant 0 : index
    %c1_20 = arith.constant 1 : index
    %69 = memref.load %arg3[%c0_19, %c1_20] : memref<4x4xf32, #tpu.memory_space<smem>>
    %70 = vector.extract_strided_slice %55 {offsets = [0, 256], sizes = [2, 256], strides = [1, 1]} : vector<2x1024xf32> to vector<2x256xf32>
    %71 = vector.broadcast %69 : f32 to vector<2x256xf32>
    %72 = arith.mulf %71, %70 : vector<2x256xf32>
    %73 = arith.addf %68, %72 : vector<2x256xf32>
    %74 = arith.addf %64, %73 : vector<2x256xf32>
    %c0_21 = arith.constant 0 : index
    %c2 = arith.constant 2 : index
    %75 = memref.load %arg2[%c0_21, %c2] : memref<4x4xf32, #tpu.memory_space<smem>>
    %76 = vector.extract_strided_slice %54 {offsets = [0, 512], sizes = [2, 256], strides = [1, 1]} : vector<2x1024xf32> to vector<2x256xf32>
    %77 = vector.broadcast %75 : f32 to vector<2x256xf32>
    %78 = arith.mulf %77, %76 : vector<2x256xf32>
    %c0_22 = arith.constant 0 : index
    %c2_23 = arith.constant 2 : index
    %79 = memref.load %arg3[%c0_22, %c2_23] : memref<4x4xf32, #tpu.memory_space<smem>>
    %80 = vector.extract_strided_slice %55 {offsets = [0, 512], sizes = [2, 256], strides = [1, 1]} : vector<2x1024xf32> to vector<2x256xf32>
    %81 = vector.broadcast %79 : f32 to vector<2x256xf32>
    %82 = arith.mulf %81, %80 : vector<2x256xf32>
    %83 = arith.addf %78, %82 : vector<2x256xf32>
    %84 = arith.addf %74, %83 : vector<2x256xf32>
    %c0_24 = arith.constant 0 : index
    %c3 = arith.constant 3 : index
    %85 = memref.load %arg2[%c0_24, %c3] : memref<4x4xf32, #tpu.memory_space<smem>>
    %86 = vector.extract_strided_slice %54 {offsets = [0, 768], sizes = [2, 256], strides = [1, 1]} : vector<2x1024xf32> to vector<2x256xf32>
    %87 = vector.broadcast %85 : f32 to vector<2x256xf32>
    %88 = arith.mulf %87, %86 : vector<2x256xf32>
    %c0_25 = arith.constant 0 : index
    %c3_26 = arith.constant 3 : index
    %89 = memref.load %arg3[%c0_25, %c3_26] : memref<4x4xf32, #tpu.memory_space<smem>>
    %90 = vector.extract_strided_slice %55 {offsets = [0, 768], sizes = [2, 256], strides = [1, 1]} : vector<2x1024xf32> to vector<2x256xf32>
    %91 = vector.broadcast %89 : f32 to vector<2x256xf32>
    %92 = arith.mulf %91, %90 : vector<2x256xf32>
    %93 = arith.addf %88, %92 : vector<2x256xf32>
    %94 = arith.addf %84, %93 : vector<2x256xf32>
    %c0_27 = arith.constant 0 : index
    %95 = memref.load %arg4[%c0_27] : memref<4xf32, #tpu.memory_space<smem>>
    %96 = vector.broadcast %95 : f32 to vector<2x256xf32>
    %97 = arith.addf %94, %96 : vector<2x256xf32>
    %cst_28 = arith.constant 0.000000e+00 : f32
    %98 = vector.broadcast %cst_28 : f32 to vector<2x256xf32>
    %99 = arith.maximumf %97, %98 : vector<2x256xf32>
    %c0_29 = arith.constant 0 : index
    %c0_30 = arith.constant 0 : index
    %100 = vector.load %arg5[%c0_29, %c0_30] : memref<2x1024xf32, #tpu.memory_space<vmem>>, vector<2x256xf32>
    tpu.vector_store %arg5[%c0_29, %c0_30], %99 {strides = array<i32>} : memref<2x1024xf32, #tpu.memory_space<vmem>>, vector<2x256xf32>,
    %c1_31 = arith.constant 1 : index
    %c0_32 = arith.constant 0 : index
    %101 = memref.load %arg2[%c1_31, %c0_32] : memref<4x4xf32, #tpu.memory_space<smem>>
    %102 = vector.extract_strided_slice %54 {offsets = [0, 0], sizes = [2, 256], strides = [1, 1]} : vector<2x1024xf32> to vector<2x256xf32>
    %103 = vector.broadcast %101 : f32 to vector<2x256xf32>
    %104 = arith.mulf %103, %102 : vector<2x256xf32>
    %c1_33 = arith.constant 1 : index
    %c0_34 = arith.constant 0 : index
    %105 = memref.load %arg3[%c1_33, %c0_34] : memref<4x4xf32, #tpu.memory_space<smem>>
    %106 = vector.extract_strided_slice %55 {offsets = [0, 0], sizes = [2, 256], strides = [1, 1]} : vector<2x1024xf32> to vector<2x256xf32>
    %107 = vector.broadcast %105 : f32 to vector<2x256xf32>
    %108 = arith.mulf %107, %106 : vector<2x256xf32>
    %109 = arith.addf %104, %108 : vector<2x256xf32>
    %c1_35 = arith.constant 1 : index
    %c1_36 = arith.constant 1 : index
    %110 = memref.load %arg2[%c1_35, %c1_36] : memref<4x4xf32, #tpu.memory_space<smem>>
    %111 = vector.extract_strided_slice %54 {offsets = [0, 256], sizes = [2, 256], strides = [1, 1]} : vector<2x1024xf32> to vector<2x256xf32>
    %112 = vector.broadcast %110 : f32 to vector<2x256xf32>
    %113 = arith.mulf %112, %111 : vector<2x256xf32>
    %c1_37 = arith.constant 1 : index
    %c1_38 = arith.constant 1 : index
    %114 = memref.load %arg3[%c1_37, %c1_38] : memref<4x4xf32, #tpu.memory_space<smem>>
    %115 = vector.extract_strided_slice %55 {offsets = [0, 256], sizes = [2, 256], strides = [1, 1]} : vector<2x1024xf32> to vector<2x256xf32>
    %116 = vector.broadcast %114 : f32 to vector<2x256xf32>
    %117 = arith.mulf %116, %115 : vector<2x256xf32>
    %118 = arith.addf %113, %117 : vector<2x256xf32>
    %119 = arith.addf %109, %118 : vector<2x256xf32>
    %c1_39 = arith.constant 1 : index
    %c2_40 = arith.constant 2 : index
    %120 = memref.load %arg2[%c1_39, %c2_40] : memref<4x4xf32, #tpu.memory_space<smem>>
    %121 = vector.extract_strided_slice %54 {offsets = [0, 512], sizes = [2, 256], strides = [1, 1]} : vector<2x1024xf32> to vector<2x256xf32>
    %122 = vector.broadcast %120 : f32 to vector<2x256xf32>
    %123 = arith.mulf %122, %121 : vector<2x256xf32>
    %c1_41 = arith.constant 1 : index
    %c2_42 = arith.constant 2 : index
    %124 = memref.load %arg3[%c1_41, %c2_42] : memref<4x4xf32, #tpu.memory_space<smem>>
    %125 = vector.extract_strided_slice %55 {offsets = [0, 512], sizes = [2, 256], strides = [1, 1]} : vector<2x1024xf32> to vector<2x256xf32>
    %126 = vector.broadcast %124 : f32 to vector<2x256xf32>
    %127 = arith.mulf %126, %125 : vector<2x256xf32>
    %128 = arith.addf %123, %127 : vector<2x256xf32>
    %129 = arith.addf %119, %128 : vector<2x256xf32>
    %c1_43 = arith.constant 1 : index
    %c3_44 = arith.constant 3 : index
    %130 = memref.load %arg2[%c1_43, %c3_44] : memref<4x4xf32, #tpu.memory_space<smem>>
    %131 = vector.extract_strided_slice %54 {offsets = [0, 768], sizes = [2, 256], strides = [1, 1]} : vector<2x1024xf32> to vector<2x256xf32>
    %132 = vector.broadcast %130 : f32 to vector<2x256xf32>
    %133 = arith.mulf %132, %131 : vector<2x256xf32>
    %c1_45 = arith.constant 1 : index
    %c3_46 = arith.constant 3 : index
    %134 = memref.load %arg3[%c1_45, %c3_46] : memref<4x4xf32, #tpu.memory_space<smem>>
    %135 = vector.extract_strided_slice %55 {offsets = [0, 768], sizes = [2, 256], strides = [1, 1]} : vector<2x1024xf32> to vector<2x256xf32>
    %136 = vector.broadcast %134 : f32 to vector<2x256xf32>
    %137 = arith.mulf %136, %135 : vector<2x256xf32>
    %138 = arith.addf %133, %137 : vector<2x256xf32>
    %139 = arith.addf %129, %138 : vector<2x256xf32>
    %c1_47 = arith.constant 1 : index
    %140 = memref.load %arg4[%c1_47] : memref<4xf32, #tpu.memory_space<smem>>
    %141 = vector.broadcast %140 : f32 to vector<2x256xf32>
    %142 = arith.addf %139, %141 : vector<2x256xf32>
    %cst_48 = arith.constant 0.000000e+00 : f32
    %143 = vector.broadcast %cst_48 : f32 to vector<2x256xf32>
    %144 = arith.maximumf %142, %143 : vector<2x256xf32>
    %c0_49 = arith.constant 0 : index
    %c256 = arith.constant 256 : index
    %145 = vector.load %arg5[%c0_49, %c256] : memref<2x1024xf32, #tpu.memory_space<vmem>>, vector<2x256xf32>
    tpu.vector_store %arg5[%c0_49, %c256], %144 {strides = array<i32>} : memref<2x1024xf32, #tpu.memory_space<vmem>>, vector<2x256xf32>,
    %c2_50 = arith.constant 2 : index
    %c0_51 = arith.constant 0 : index
    %146 = memref.load %arg2[%c2_50, %c0_51] : memref<4x4xf32, #tpu.memory_space<smem>>
    %147 = vector.extract_strided_slice %54 {offsets = [0, 0], sizes = [2, 256], strides = [1, 1]} : vector<2x1024xf32> to vector<2x256xf32>
    %148 = vector.broadcast %146 : f32 to vector<2x256xf32>
    %149 = arith.mulf %148, %147 : vector<2x256xf32>
    %c2_52 = arith.constant 2 : index
    %c0_53 = arith.constant 0 : index
    %150 = memref.load %arg3[%c2_52, %c0_53] : memref<4x4xf32, #tpu.memory_space<smem>>
    %151 = vector.extract_strided_slice %55 {offsets = [0, 0], sizes = [2, 256], strides = [1, 1]} : vector<2x1024xf32> to vector<2x256xf32>
    %152 = vector.broadcast %150 : f32 to vector<2x256xf32>
    %153 = arith.mulf %152, %151 : vector<2x256xf32>
    %154 = arith.addf %149, %153 : vector<2x256xf32>
    %c2_54 = arith.constant 2 : index
    %c1_55 = arith.constant 1 : index
    %155 = memref.load %arg2[%c2_54, %c1_55] : memref<4x4xf32, #tpu.memory_space<smem>>
    %156 = vector.extract_strided_slice %54 {offsets = [0, 256], sizes = [2, 256], strides = [1, 1]} : vector<2x1024xf32> to vector<2x256xf32>
    %157 = vector.broadcast %155 : f32 to vector<2x256xf32>
    %158 = arith.mulf %157, %156 : vector<2x256xf32>
    %c2_56 = arith.constant 2 : index
    %c1_57 = arith.constant 1 : index
    %159 = memref.load %arg3[%c2_56, %c1_57] : memref<4x4xf32, #tpu.memory_space<smem>>
    %160 = vector.extract_strided_slice %55 {offsets = [0, 256], sizes = [2, 256], strides = [1, 1]} : vector<2x1024xf32> to vector<2x256xf32>
    %161 = vector.broadcast %159 : f32 to vector<2x256xf32>
    %162 = arith.mulf %161, %160 : vector<2x256xf32>
    %163 = arith.addf %158, %162 : vector<2x256xf32>
    %164 = arith.addf %154, %163 : vector<2x256xf32>
    %c2_58 = arith.constant 2 : index
    %c2_59 = arith.constant 2 : index
    %165 = memref.load %arg2[%c2_58, %c2_59] : memref<4x4xf32, #tpu.memory_space<smem>>
    %166 = vector.extract_strided_slice %54 {offsets = [0, 512], sizes = [2, 256], strides = [1, 1]} : vector<2x1024xf32> to vector<2x256xf32>
    %167 = vector.broadcast %165 : f32 to vector<2x256xf32>
    %168 = arith.mulf %167, %166 : vector<2x256xf32>
    %c2_60 = arith.constant 2 : index
    %c2_61 = arith.constant 2 : index
    %169 = memref.load %arg3[%c2_60, %c2_61] : memref<4x4xf32, #tpu.memory_space<smem>>
    %170 = vector.extract_strided_slice %55 {offsets = [0, 512], sizes = [2, 256], strides = [1, 1]} : vector<2x1024xf32> to vector<2x256xf32>
    %171 = vector.broadcast %169 : f32 to vector<2x256xf32>
    %172 = arith.mulf %171, %170 : vector<2x256xf32>
    %173 = arith.addf %168, %172 : vector<2x256xf32>
    %174 = arith.addf %164, %173 : vector<2x256xf32>
    %c2_62 = arith.constant 2 : index
    %c3_63 = arith.constant 3 : index
    %175 = memref.load %arg2[%c2_62, %c3_63] : memref<4x4xf32, #tpu.memory_space<smem>>
    %176 = vector.extract_strided_slice %54 {offsets = [0, 768], sizes = [2, 256], strides = [1, 1]} : vector<2x1024xf32> to vector<2x256xf32>
    %177 = vector.broadcast %175 : f32 to vector<2x256xf32>
    %178 = arith.mulf %177, %176 : vector<2x256xf32>
    %c2_64 = arith.constant 2 : index
    %c3_65 = arith.constant 3 : index
    %179 = memref.load %arg3[%c2_64, %c3_65] : memref<4x4xf32, #tpu.memory_space<smem>>
    %180 = vector.extract_strided_slice %55 {offsets = [0, 768], sizes = [2, 256], strides = [1, 1]} : vector<2x1024xf32> to vector<2x256xf32>
    %181 = vector.broadcast %179 : f32 to vector<2x256xf32>
    %182 = arith.mulf %181, %180 : vector<2x256xf32>
    %183 = arith.addf %178, %182 : vector<2x256xf32>
    %184 = arith.addf %174, %183 : vector<2x256xf32>
    %c2_66 = arith.constant 2 : index
    %185 = memref.load %arg4[%c2_66] : memref<4xf32, #tpu.memory_space<smem>>
    %186 = vector.broadcast %185 : f32 to vector<2x256xf32>
    %187 = arith.addf %184, %186 : vector<2x256xf32>
    %cst_67 = arith.constant 0.000000e+00 : f32
    %188 = vector.broadcast %cst_67 : f32 to vector<2x256xf32>
    %189 = arith.maximumf %187, %188 : vector<2x256xf32>
    %c0_68 = arith.constant 0 : index
    %c512 = arith.constant 512 : index
    %190 = vector.load %arg5[%c0_68, %c512] : memref<2x1024xf32, #tpu.memory_space<vmem>>, vector<2x256xf32>
    tpu.vector_store %arg5[%c0_68, %c512], %189 {strides = array<i32>} : memref<2x1024xf32, #tpu.memory_space<vmem>>, vector<2x256xf32>,
    %c3_69 = arith.constant 3 : index
    %c0_70 = arith.constant 0 : index
    %191 = memref.load %arg2[%c3_69, %c0_70] : memref<4x4xf32, #tpu.memory_space<smem>>
    %192 = vector.extract_strided_slice %54 {offsets = [0, 0], sizes = [2, 256], strides = [1, 1]} : vector<2x1024xf32> to vector<2x256xf32>
    %193 = vector.broadcast %191 : f32 to vector<2x256xf32>
    %194 = arith.mulf %193, %192 : vector<2x256xf32>
    %c3_71 = arith.constant 3 : index
    %c0_72 = arith.constant 0 : index
    %195 = memref.load %arg3[%c3_71, %c0_72] : memref<4x4xf32, #tpu.memory_space<smem>>
    %196 = vector.extract_strided_slice %55 {offsets = [0, 0], sizes = [2, 256], strides = [1, 1]} : vector<2x1024xf32> to vector<2x256xf32>
    %197 = vector.broadcast %195 : f32 to vector<2x256xf32>
    %198 = arith.mulf %197, %196 : vector<2x256xf32>
    %199 = arith.addf %194, %198 : vector<2x256xf32>
    %c3_73 = arith.constant 3 : index
    %c1_74 = arith.constant 1 : index
    %200 = memref.load %arg2[%c3_73, %c1_74] : memref<4x4xf32, #tpu.memory_space<smem>>
    %201 = vector.extract_strided_slice %54 {offsets = [0, 256], sizes = [2, 256], strides = [1, 1]} : vector<2x1024xf32> to vector<2x256xf32>
    %202 = vector.broadcast %200 : f32 to vector<2x256xf32>
    %203 = arith.mulf %202, %201 : vector<2x256xf32>
    %c3_75 = arith.constant 3 : index
    %c1_76 = arith.constant 1 : index
    %204 = memref.load %arg3[%c3_75, %c1_76] : memref<4x4xf32, #tpu.memory_space<smem>>
    %205 = vector.extract_strided_slice %55 {offsets = [0, 256], sizes = [2, 256], strides = [1, 1]} : vector<2x1024xf32> to vector<2x256xf32>
    %206 = vector.broadcast %204 : f32 to vector<2x256xf32>
    %207 = arith.mulf %206, %205 : vector<2x256xf32>
    %208 = arith.addf %203, %207 : vector<2x256xf32>
    %209 = arith.addf %199, %208 : vector<2x256xf32>
    %c3_77 = arith.constant 3 : index
    %c2_78 = arith.constant 2 : index
    %210 = memref.load %arg2[%c3_77, %c2_78] : memref<4x4xf32, #tpu.memory_space<smem>>
    %211 = vector.extract_strided_slice %54 {offsets = [0, 512], sizes = [2, 256], strides = [1, 1]} : vector<2x1024xf32> to vector<2x256xf32>
    %212 = vector.broadcast %210 : f32 to vector<2x256xf32>
    %213 = arith.mulf %212, %211 : vector<2x256xf32>
    %c3_79 = arith.constant 3 : index
    %c2_80 = arith.constant 2 : index
    %214 = memref.load %arg3[%c3_79, %c2_80] : memref<4x4xf32, #tpu.memory_space<smem>>
    %215 = vector.extract_strided_slice %55 {offsets = [0, 512], sizes = [2, 256], strides = [1, 1]} : vector<2x1024xf32> to vector<2x256xf32>
    %216 = vector.broadcast %214 : f32 to vector<2x256xf32>
    %217 = arith.mulf %216, %215 : vector<2x256xf32>
    %218 = arith.addf %213, %217 : vector<2x256xf32>
    %219 = arith.addf %209, %218 : vector<2x256xf32>
    %c3_81 = arith.constant 3 : index
    %c3_82 = arith.constant 3 : index
    %220 = memref.load %arg2[%c3_81, %c3_82] : memref<4x4xf32, #tpu.memory_space<smem>>
    %221 = vector.extract_strided_slice %54 {offsets = [0, 768], sizes = [2, 256], strides = [1, 1]} : vector<2x1024xf32> to vector<2x256xf32>
    %222 = vector.broadcast %220 : f32 to vector<2x256xf32>
    %223 = arith.mulf %222, %221 : vector<2x256xf32>
    %c3_83 = arith.constant 3 : index
    %c3_84 = arith.constant 3 : index
    %224 = memref.load %arg3[%c3_83, %c3_84] : memref<4x4xf32, #tpu.memory_space<smem>>
    %225 = vector.extract_strided_slice %55 {offsets = [0, 768], sizes = [2, 256], strides = [1, 1]} : vector<2x1024xf32> to vector<2x256xf32>
    %226 = vector.broadcast %224 : f32 to vector<2x256xf32>
    %227 = arith.mulf %226, %225 : vector<2x256xf32>
    %228 = arith.addf %223, %227 : vector<2x256xf32>
    %229 = arith.addf %219, %228 : vector<2x256xf32>
    %c3_85 = arith.constant 3 : index
    %230 = memref.load %arg4[%c3_85] : memref<4xf32, #tpu.memory_space<smem>>
    %231 = vector.broadcast %230 : f32 to vector<2x256xf32>
    %232 = arith.addf %229, %231 : vector<2x256xf32>
    %cst_86 = arith.constant 0.000000e+00 : f32
    %233 = vector.broadcast %cst_86 : f32 to vector<2x256xf32>
    %234 = arith.maximumf %232, %233 : vector<2x256xf32>
    %c0_87 = arith.constant 0 : index
    %c768 = arith.constant 768 : index
    %235 = vector.load %arg5[%c0_87, %c768] : memref<2x1024xf32, #tpu.memory_space<vmem>>, vector<2x256xf32>
    tpu.vector_store %arg5[%c0_87, %c768], %234 {strides = array<i32>} : memref<2x1024xf32, #tpu.memory_space<vmem>>, vector<2x256xf32>,
    return
  }
  func.func @transform_0(%arg0: i32) -> (i32, i32) {
    %c0_i32 = arith.constant 0 : i32
    %c0_i32_0 = arith.constant 0 : i32
    return %arg0, %c0_i32 : i32, i32
  }
  func.func @transform_1(%arg0: i32) -> (i32, i32) {
    %c0_i32 = arith.constant 0 : i32
    %c0_i32_0 = arith.constant 0 : i32
    %c0_i32_1 = arith.constant 0 : i32
    return %c0_i32, %c0_i32_0 : i32, i32
  }
  func.func @transform_2(%arg0: i32) -> (i32, i32) {
    %c0_i32 = arith.constant 0 : i32
    %c0_i32_0 = arith.constant 0 : i32
    %c0_i32_1 = arith.constant 0 : i32
    return %c0_i32, %c0_i32_0 : i32, i32
  }
  func.func @transform_3(%arg0: i32) -> i32 {
    %c0_i32 = arith.constant 0 : i32
    %c0_i32_0 = arith.constant 0 : i32
    return %c0_i32 : i32
  }
  func.func @transform_4(%arg0: i32) -> (i32, i32) {
    %c0_i32 = arith.constant 0 : i32
    %c0_i32_0 = arith.constant 0 : i32
    return %arg0, %c0_i32 : i32, i32
  }
}

</mosaic_0001>

<llo_original>
// kernel: tpu_custom_call.1
$region0: #{tpu_custom_call.1}
  #allocation0 [shape = 'u32[]', space=smem, size = 0x4, offset = 0x4, fixed_abs, tag = 'smem constant byte address 0x4 - core index']
  #allocation1 [shape = 'u32[144,128]{1,0:T(1,128)}', space=vmem, size = 0x12000, scoped, tag = 'internal scratch']
  %s0 = inlined_call_operand.hbm [shape: f32[2,1024], index: 0, kind: input, shape index: {}]
  %s1 = inlined_call_operand.hbm [shape: f32[4,4], index: 1, kind: input, shape index: {}]
  %s2 = inlined_call_operand.vmem [shape: f32[4,4], index: 2, kind: input, shape index: {}]
  %s3 = inlined_call_operand.vmem [shape: f32[4], index: 3, kind: input, shape index: {}]
  %s4 = inlined_call_operand.hbm [shape: f32[2,1024], index: 4, kind: output, shape index: {}]
  %s5 = sld [smem:[#allocation0]]
  $region42: #{tpu_custom_call.1} parent=0
    _
  %s7 = ssub.s32 1, %s5
  %s8 = scalar_select 0, %s7, %s5
  $region1: #{tpu_custom_call.1} parent=0
    #allocation2 [shape = 'u8[8192]{0}', space=vmem, size = 0x2000, scoped, tag = 'input window, operand 0, single buffered']
    #allocation3 [shape = 's32[1]{0}', space=sflag, size = 0x4, scoped, tag = 'scoped memory for tpu_custom_call.1']
    #allocation4 [shape = 's32[1]{0}', space=sflag, size = 0x4, scoped, tag = 'scoped memory for tpu_custom_call.1']
    #allocation5 [shape = 's32[1]{0}', space=sflag, size = 0x4, scoped, tag = 'scoped memory for tpu_custom_call.1']
    #allocation6 [shape = 's32[1]{0}', space=sflag, size = 0x4, scoped, tag = 'scoped memory for tpu_custom_call.1']
    #allocation7 [shape = 'u8[2048]{0}', space=smem, size = 0x800, scoped, tag = 'input window, operand 1, single buffered']
    #allocation8 [shape = 'u8[2048]{0}', space=smem, size = 0x800, scoped, tag = 'input window, operand 2, single buffered']
    #allocation9 [shape = 'u8[512]{0}', space=smem, size = 0x200, scoped, tag = 'input window, operand 3, single buffered']
    #allocation10 [shape = 's32[1]{0}', space=sflag, size = 0x4, scoped, tag = 'scoped memory for tpu_custom_call.1']
    #allocation11 [shape = 'u8[8192]{0}', space=vmem, size = 0x2000, scoped, tag = 'output window, operand 0, single buffered']
    %9 = vsyncpa [#allocation3], 0
    %10 = vsyncpa [#allocation5], 0
    %11 = vsyncpa [#allocation6], 0
    %12 = vsyncpa [#allocation10], 0
    %13 = vsyncpa [#allocation4], 0
    // Predicated region
    $region2: #{tpu_custom_call.1} parent=1 // pred_check
      _
    $region3: #{tpu_custom_call.1} parent=1 // pred_check_branch
      %15 = sbr.rel (0) target = $region5
    $region4: #{tpu_custom_call.1} parent=1 // pred_region
      %s17 = ssub.s32 256, 256
      %18 = vsyncadd [#allocation3], %s17
      %s20 = sshll.u32 [#allocation2], 4
      %s21 = int_to_ptr.vmem [resolvable:$true] %s20
      %23 = dma.hbm_to_vmem [thread:$0]  %s0, 256, %s21, [#allocation3]
    $region5: #{tpu_custom_call.1} parent=1 // pred_fallthru
      _
    // Predicated region
    $region6: #{tpu_custom_call.1} parent=1 // pred_check
      _
    $region7: #{tpu_custom_call.1} parent=1 // pred_check_branch
      %25 = sbr.rel (0) target = $region9
    $region8: #{tpu_custom_call.1} parent=1 // pred_region
      %s27 = ssub.s32 64, 64
      %28 = vsyncadd [#allocation5], %s27
      %31 = dma.hbm_to_smem %s1, 64, [#allocation7], [#allocation5]
    $region9: #{tpu_custom_call.1} parent=1 // pred_fallthru
      _
    // Predicated region
    $region10: #{tpu_custom_call.1} parent=1 // pred_check
      _
    $region11: #{tpu_custom_call.1} parent=1 // pred_check_branch
      %33 = sbr.rel (0) target = $region13
    $region12: #{tpu_custom_call.1} parent=1 // pred_region
      %s35 = ssub.s32 64, 64
      %36 = vsyncadd [#allocation6], %s35
      %s38 = sshll.u32 %s2, 4
      %s39 = int_to_ptr.vmem [resolvable:$true] %s38
      %41 = dma.vmem_to_smem %s39, 64, [#allocation8], [#allocation6]
    $region13: #{tpu_custom_call.1} parent=1 // pred_fallthru
      _
    // Predicated region
    $region14: #{tpu_custom_call.1} parent=1 // pred_check
      _
    $region15: #{tpu_custom_call.1} parent=1 // pred_check_branch
      %43 = sbr.rel (0) target = $region17
    $region16: #{tpu_custom_call.1} parent=1 // pred_region
      %s45 = ssub.s32 16, 16
      %46 = vsyncadd [#allocation10], %s45
      %s48 = sshll.u32 %s3, 4
      %s49 = int_to_ptr.vmem [resolvable:$true] %s48
      %51 = dma.vmem_to_smem %s49, 16, [#allocation9], [#allocation10]
    $region17: #{tpu_custom_call.1} parent=1 // pred_fallthru
      _
    // Predicated region
    $region18: #{tpu_custom_call.1} parent=1 // pred_check
      _
    $region19: #{tpu_custom_call.1} parent=1 // pred_check_branch
      %53 = sbr.rel (0) target = $region21
    $region20: #{tpu_custom_call.1} parent=1 // pred_region
      %54 = dma.done [#allocation3], 256
    $region21: #{tpu_custom_call.1} parent=1 // pred_fallthru
      _
    // Predicated region
    $region22: #{tpu_custom_call.1} parent=1 // pred_check
      _
    $region23: #{tpu_custom_call.1} parent=1 // pred_check_branch
      %56 = sbr.rel (0) target = $region25
    $region24: #{tpu_custom_call.1} parent=1 // pred_region
      %57 = dma.done [#allocation5], 64
    $region25: #{tpu_custom_call.1} parent=1 // pred_fallthru
      _
    // Predicated region
    $region26: #{tpu_custom_call.1} parent=1 // pred_check
      _
    $region27: #{tpu_custom_call.1} parent=1 // pred_check_branch
      %59 = sbr.rel (0) target = $region29
    $region28: #{tpu_custom_call.1} parent=1 // pred_region
      %60 = dma.done [#allocation6], 64
    $region29: #{tpu_custom_call.1} parent=1 // pred_fallthru
      _
    // Predicated region
    $region30: #{tpu_custom_call.1} parent=1 // pred_check
      _
    $region31: #{tpu_custom_call.1} parent=1 // pred_check_branch
      %62 = sbr.rel (0) target = $region33
    $region32: #{tpu_custom_call.1} parent=1 // pred_region
      %63 = dma.done [#allocation10], 16
    $region33: #{tpu_custom_call.1} parent=1 // pred_fallthru
      _
    %64 = sfence
    %v65 = vld [vmem:[#allocation2] sm:$0xff]
    %v66 = vld [vmem:[#allocation2 + $0x8] sm:$0xff]
    %v67 = vlaneseq
    %v68 = vand.u32 %v67, 127
    %v69 = vadd.s32 %v68, 128
    %v70 = vadd.s32 %v68, 256
    %v71 = vadd.s32 %v68, 384
    %v72 = vadd.s32 %v68, 512
    %v73 = vadd.s32 %v68, 640
    %v74 = vadd.s32 %v68, 768
    %v75 = vadd.s32 %v68, 896
    %v76 = vand.u32 %v68, 15
    %v77 = vand.u32 %v69, 15
    %v78 = vand.u32 %v70, 15
    %v79 = vand.u32 %v71, 15
    %v80 = vand.u32 %v72, 15
    %v81 = vand.u32 %v73, 15
    %v82 = vand.u32 %v74, 15
    %v83 = vand.u32 %v75, 15
    %v84 = vshra.s32 %v68, 4
    %v85 = vshra.s32 %v69, 4
    %v86 = vshra.s32 %v70, 4
    %v87 = vshra.s32 %v71, 4
    %v88 = vshra.s32 %v72, 4
    %v89 = vshra.s32 %v73, 4
    %v90 = vshra.s32 %v74, 4
    %v91 = vshra.s32 %v75, 4
    %v92 = vand.u32 %v84, 15
    %v93 = vand.u32 %v85, 15
    %v94 = vand.u32 %v86, 15
    %v95 = vand.u32 %v87, 15
    %v96 = vand.u32 %v88, 15
    %v97 = vand.u32 %v89, 15
    %v98 = vand.u32 %v90, 15
    %v99 = vand.u32 %v91, 15
    %vm100 = vcmp.ne.s32.totalorder %v76, 0
    %vm101 = vcmp.ne.s32.totalorder %v77, 0
    %vm102 = vcmp.ne.s32.totalorder %v78, 0
    %vm103 = vcmp.ne.s32.totalorder %v79, 0
    %vm104 = vcmp.ne.s32.totalorder %v80, 0
    %vm105 = vcmp.ne.s32.totalorder %v81, 0
    %vm106 = vcmp.ne.s32.totalorder %v82, 0
    %vm107 = vcmp.ne.s32.totalorder %v83, 0
    %vm108 = vcmp.ne.s32.totalorder %v76, 15
    %vm109 = vcmp.ne.s32.totalorder %v77, 15
    %vm110 = vcmp.ne.s32.totalorder %v78, 15
    %vm111 = vcmp.ne.s32.totalorder %v79, 15
    %vm112 = vcmp.ne.s32.totalorder %v80, 15
    %vm113 = vcmp.ne.s32.totalorder %v81, 15
    %vm114 = vcmp.ne.s32.totalorder %v82, 15
    %vm115 = vcmp.ne.s32.totalorder %v83, 15
    %vm116 = vcmp.ne.s32.totalorder %v92, 0
    %vm117 = vcmp.ne.s32.totalorder %v93, 0
    %vm118 = vcmp.ne.s32.totalorder %v94, 0
    %vm119 = vcmp.ne.s32.totalorder %v95, 0
    %vm120 = vcmp.ne.s32.totalorder %v96, 0
    %vm121 = vcmp.ne.s32.totalorder %v97, 0
    %vm122 = vcmp.ne.s32.totalorder %v98, 0
    %vm123 = vcmp.ne.s32.totalorder %v99, 0
    %vm124 = vcmp.ne.s32.totalorder %v92, 15
    %vm125 = vcmp.ne.s32.totalorder %v93, 15
    %vm126 = vcmp.ne.s32.totalorder %v94, 15
    %vm127 = vcmp.ne.s32.totalorder %v95, 15
    %vm128 = vcmp.ne.s32.totalorder %v96, 15
    %vm129 = vcmp.ne.s32.totalorder %v97, 15
    %vm130 = vcmp.ne.s32.totalorder %v98, 15
    %vm131 = vcmp.ne.s32.totalorder %v99, 15
    %v134 = vcombine.high %v65, %v65
    %v136 = vunpack.c.l.s4 1983009808
    %v137 = vunpack.c.0.s8 %v136
    %v138 = vlaneseq
    %v139 = vshrl.u32 %v138, 7
    %v140 = vsub.s32 %v137, %v139
    %v141 = vrot.slane %v65, %v140
    %v143 = vunpack.c.l.s4 1983009808
    %v144 = vunpack.c.0.s8 %v143
    %v145 = vlaneseq
    %v146 = vshrl.u32 %v145, 7
    %v147 = vsub.s32 %v144, %v146
    %v148 = vrot.slane %v134, %v147
    %v149 = vcombine.high %v141, %v141
    %v150 = vcombine.high %v148, %v148
    %v151 = vcombine.high %v66, %v66
    %v153 = vunpack.c.l.s4 1983009808
    %v154 = vunpack.c.0.s8 %v153
    %v155 = vlaneseq
    %v156 = vshrl.u32 %v155, 7
    %v157 = vsub.s32 %v154, %v156
    %v158 = vrot.slane %v66, %v157
    %v160 = vunpack.c.l.s4 1983009808
    %v161 = vunpack.c.0.s8 %v160
    %v162 = vlaneseq
    %v163 = vshrl.u32 %v162, 7
    %v164 = vsub.s32 %v161, %v163
    %v165 = vrot.slane %v151, %v164
    %v166 = vcombine.high %v158, %v158
    %v167 = vcombine.high %v165, %v165
    %176 = vrot.lane.b32.xlu0 %v141, 1
    %v177 = vpop.permute.xlu0 %176
    %178 = vrot.lane.b32.xlu0 %v149, 1
    %v179 = vpop.permute.xlu0 %178
    %180 = vrot.lane.b32.xlu0 %v148, 1
    %v181 = vpop.permute.xlu0 %180
    %182 = vrot.lane.b32.xlu0 %v150, 1
    %v183 = vpop.permute.xlu0 %182
    %184 = vrot.lane.b32.xlu0 %v158, 1
    %v185 = vpop.permute.xlu0 %184
    %186 = vrot.lane.b32.xlu0 %v166, 1
    %v187 = vpop.permute.xlu0 %186
    %188 = vrot.lane.b32.xlu0 %v165, 1
    %v189 = vpop.permute.xlu0 %188
    %190 = vrot.lane.b32.xlu0 %v167, 1
    %v191 = vpop.permute.xlu0 %190
    %vm192 = vcmp.lt.s32.totalorder %v68, 1
    %v193 = vsel %vm192, %v189, %v191
    %v194 = vsel %vm192, %v187, %v189
    %v195 = vsel %vm192, %v185, %v187
    %v196 = vsel %vm192, %v183, %v185
    %v197 = vsel %vm192, %v181, %v183
    %v198 = vsel %vm192, %v179, %v181
    %v199 = vsel %vm192, %v177, %v179
    %v200 = vsel %vm192, %v191, %v177
    %v201 = vsel %vm100, 1, 0
    %v202 = vsel %vm101, 1, 0
    %v203 = vsel %vm102, 1, 0
    %v204 = vsel %vm103, 1, 0
    %v205 = vsel %vm104, 1, 0
    %v206 = vsel %vm105, 1, 0
    %v207 = vsel %vm106, 1, 0
    %v208 = vsel %vm107, 1, 0
    %vm209 = vcmp.eq.s32.totalorder %v201, 1
    %vm210 = vcmp.eq.s32.totalorder %v202, 1
    %vm211 = vcmp.eq.s32.totalorder %v203, 1
    %vm212 = vcmp.eq.s32.totalorder %v204, 1
    %vm213 = vcmp.eq.s32.totalorder %v205, 1
    %vm214 = vcmp.eq.s32.totalorder %v206, 1
    %vm215 = vcmp.eq.s32.totalorder %v207, 1
    %vm216 = vcmp.eq.s32.totalorder %v208, 1
    %v217 = vsel %vm209, %v200, 0.0
    %v218 = vsel %vm210, %v199, 0.0
    %v219 = vsel %vm211, %v198, 0.0
    %v220 = vsel %vm212, %v197, 0.0
    %v221 = vsel %vm213, %v196, 0.0
    %v222 = vsel %vm214, %v195, 0.0
    %v223 = vsel %vm215, %v194, 0.0
    %v224 = vsel %vm216, %v193, 0.0
    %225 = vrot.lane.b32.xlu0 %v141, 127
    %v226 = vpop.permute.xlu0 %225
    %227 = vrot.lane.b32.xlu0 %v149, 127
    %v228 = vpop.permute.xlu0 %227
    %229 = vrot.lane.b32.xlu0 %v148, 127
    %v230 = vpop.permute.xlu0 %229
    %231 = vrot.lane.b32.xlu0 %v150, 127
    %v232 = vpop.permute.xlu0 %231
    %233 = vrot.lane.b32.xlu0 %v158, 127
    %v234 = vpop.permute.xlu0 %233
    %235 = vrot.lane.b32.xlu0 %v166, 127
    %v236 = vpop.permute.xlu0 %235
    %237 = vrot.lane.b32.xlu0 %v165, 127
    %v238 = vpop.permute.xlu0 %237
    %239 = vrot.lane.b32.xlu0 %v167, 127
    %v240 = vpop.permute.xlu0 %239
    %vm241 = vcmp.lt.s32.totalorder %v68, 127
    %v242 = vsel %vm241, %v238, %v240
    %v243 = vsel %vm241, %v236, %v238
    %v244 = vsel %vm241, %v234, %v236
    %v245 = vsel %vm241, %v232, %v234
    %v246 = vsel %vm241, %v230, %v232
    %v247 = vsel %vm241, %v228, %v230
    %v248 = vsel %vm241, %v226, %v228
    %v249 = vsel %vm241, %v240, %v226
    %v250 = vsel %vm108, 1, 0
    %v251 = vsel %vm109, 1, 0
    %v252 = vsel %vm110, 1, 0
    %v253 = vsel %vm111, 1, 0
    %v254 = vsel %vm112, 1, 0
    %v255 = vsel %vm113, 1, 0
    %v256 = vsel %vm114, 1, 0
    %v257 = vsel %vm115, 1, 0
    %vm258 = vcmp.eq.s32.totalorder %v250, 1
    %vm259 = vcmp.eq.s32.totalorder %v251, 1
    %vm260 = vcmp.eq.s32.totalorder %v252, 1
    %vm261 = vcmp.eq.s32.totalorder %v253, 1
    %vm262 = vcmp.eq.s32.totalorder %v254, 1
    %vm263 = vcmp.eq.s32.totalorder %v255, 1
    %vm264 = vcmp.eq.s32.totalorder %v256, 1
    %vm265 = vcmp.eq.s32.totalorder %v257, 1
    %v266 = vsel %vm258, %v248, 0.0
    %v267 = vsel %vm259, %v247, 0.0
    %v268 = vsel %vm260, %v246, 0.0
    %v269 = vsel %vm261, %v245, 0.0
    %v270 = vsel %vm262, %v244, 0.0
    %v271 = vsel %vm263, %v243, 0.0
    %v272 = vsel %vm264, %v242, 0.0
    %v273 = vsel %vm265, %v249, 0.0
    %v274 = vsub.f32 %v266, %v217
    %v275 = vsub.f32 %v267, %v218
    %v276 = vsub.f32 %v268, %v219
    %v277 = vsub.f32 %v269, %v220
    %v278 = vsub.f32 %v270, %v221
    %v279 = vsub.f32 %v271, %v222
    %v280 = vsub.f32 %v272, %v223
    %v281 = vsub.f32 %v273, %v224
    %v282 = vmul.f32 %v65, 2.0
    %v283 = vmul.f32 %v66, 2.0
    %v286 = vcombine.high %v282, %v282
    %v288 = vunpack.c.l.s4 1983009808
    %v289 = vunpack.c.0.s8 %v288
    %v290 = vlaneseq
    %v291 = vshrl.u32 %v290, 7
    %v292 = vsub.s32 %v289, %v291
    %v293 = vrot.slane %v282, %v292
    %v295 = vunpack.c.l.s4 1983009808
    %v296 = vunpack.c.0.s8 %v295
    %v297 = vlaneseq
    %v298 = vshrl.u32 %v297, 7
    %v299 = vsub.s32 %v296, %v298
    %v300 = vrot.slane %v286, %v299
    %v301 = vcombine.high %v293, %v293
    %v302 = vcombine.high %v300, %v300
    %v303 = vcombine.high %v283, %v283
    %v305 = vunpack.c.l.s4 1983009808
    %v306 = vunpack.c.0.s8 %v305
    %v307 = vlaneseq
    %v308 = vshrl.u32 %v307, 7
    %v309 = vsub.s32 %v306, %v308
    %v310 = vrot.slane %v283, %v309
    %v312 = vunpack.c.l.s4 1983009808
    %v313 = vunpack.c.0.s8 %v312
    %v314 = vlaneseq
    %v315 = vshrl.u32 %v314, 7
    %v316 = vsub.s32 %v313, %v315
    %v317 = vrot.slane %v303, %v316
    %v318 = vcombine.high %v310, %v310
    %v319 = vcombine.high %v317, %v317
    %v328 = vadd.f32 %v217, %v293
    %v329 = vadd.f32 %v218, %v301
    %v330 = vadd.f32 %v219, %v300
    %v331 = vadd.f32 %v220, %v302
    %v332 = vadd.f32 %v221, %v310
    %v333 = vadd.f32 %v222, %v318
    %v334 = vadd.f32 %v223, %v317
    %v335 = vadd.f32 %v224, %v319
    %v336 = vadd.f32 %v328, %v266
    %v337 = vadd.f32 %v329, %v267
    %v338 = vadd.f32 %v330, %v268
    %v339 = vadd.f32 %v331, %v269
    %v340 = vadd.f32 %v332, %v270
    %v341 = vadd.f32 %v333, %v271
    %v342 = vadd.f32 %v334, %v272
    %v343 = vadd.f32 %v335, %v273
    %344 = vrot.lane.b32.xlu0 %v274, 16
    %v345 = vpop.permute.xlu0 %344
    %346 = vrot.lane.b32.xlu0 %v275, 16
    %v347 = vpop.permute.xlu0 %346
    %348 = vrot.lane.b32.xlu0 %v276, 16
    %v349 = vpop.permute.xlu0 %348
    %350 = vrot.lane.b32.xlu0 %v277, 16
    %v351 = vpop.permute.xlu0 %350
    %352 = vrot.lane.b32.xlu0 %v278, 16
    %v353 = vpop.permute.xlu0 %352
    %354 = vrot.lane.b32.xlu0 %v279, 16
    %v355 = vpop.permute.xlu0 %354
    %356 = vrot.lane.b32.xlu0 %v280, 16
    %v357 = vpop.permute.xlu0 %356
    %358 = vrot.lane.b32.xlu0 %v281, 16
    %v359 = vpop.permute.xlu0 %358
    %vm360 = vcmp.lt.s32.totalorder %v68, 16
    %v361 = vsel %vm360, %v357, %v359
    %v362 = vsel %vm360, %v355, %v357
    %v363 = vsel %vm360, %v353, %v355
    %v364 = vsel %vm360, %v351, %v353
    %v365 = vsel %vm360, %v349, %v351
    %v366 = vsel %vm360, %v347, %v349
    %v367 = vsel %vm360, %v345, %v347
    %v368 = vsel %vm360, %v359, %v345
    %v369 = vsel %vm116, 1, 0
    %v370 = vsel %vm117, 1, 0
    %v371 = vsel %vm118, 1, 0
    %v372 = vsel %vm119, 1, 0
    %v373 = vsel %vm120, 1, 0
    %v374 = vsel %vm121, 1, 0
    %v375 = vsel %vm122, 1, 0
    %v376 = vsel %vm123, 1, 0
    %vm377 = vcmp.eq.s32.totalorder %v369, 1
    %vm378 = vcmp.eq.s32.totalorder %v370, 1
    %vm379 = vcmp.eq.s32.totalorder %v371, 1
    %vm380 = vcmp.eq.s32.totalorder %v372, 1
    %vm381 = vcmp.eq.s32.totalorder %v373, 1
    %vm382 = vcmp.eq.s32.totalorder %v374, 1
    %vm383 = vcmp.eq.s32.totalorder %v375, 1
    %vm384 = vcmp.eq.s32.totalorder %v376, 1
    %v385 = vsel %vm377, %v368, 0.0
    %v386 = vsel %vm378, %v367, 0.0
    %v387 = vsel %vm379, %v366, 0.0
    %v388 = vsel %vm380, %v365, 0.0
    %v389 = vsel %vm381, %v364, 0.0
    %v390 = vsel %vm382, %v363, 0.0
    %v391 = vsel %vm383, %v362, 0.0
    %v392 = vsel %vm384, %v361, 0.0
    %393 = vrot.lane.b32.xlu0 %v274, 112
    %v394 = vpop.permute.xlu0 %393
    %395 = vrot.lane.b32.xlu0 %v275, 112
    %v396 = vpop.permute.xlu0 %395
    %397 = vrot.lane.b32.xlu0 %v276, 112
    %v398 = vpop.permute.xlu0 %397
    %399 = vrot.lane.b32.xlu0 %v277, 112
    %v400 = vpop.permute.xlu0 %399
    %401 = vrot.lane.b32.xlu0 %v278, 112
    %v402 = vpop.permute.xlu0 %401
    %403 = vrot.lane.b32.xlu0 %v279, 112
    %v404 = vpop.permute.xlu0 %403
    %405 = vrot.lane.b32.xlu0 %v280, 112
    %v406 = vpop.permute.xlu0 %405
    %407 = vrot.lane.b32.xlu0 %v281, 112
    %v408 = vpop.permute.xlu0 %407
    %vm409 = vcmp.lt.s32.totalorder %v68, 112
    %v410 = vsel %vm409, %v406, %v408
    %v411 = vsel %vm409, %v404, %v406
    %v412 = vsel %vm409, %v402, %v404
    %v413 = vsel %vm409, %v400, %v402
    %v414 = vsel %vm409, %v398, %v400
    %v415 = vsel %vm409, %v396, %v398
    %v416 = vsel %vm409, %v394, %v396
    %v417 = vsel %vm409, %v408, %v394
    %v418 = vsel %vm124, 1, 0
    %v419 = vsel %vm125, 1, 0
    %v420 = vsel %vm126, 1, 0
    %v421 = vsel %vm127, 1, 0
    %v422 = vsel %vm128, 1, 0
    %v423 = vsel %vm129, 1, 0
    %v424 = vsel %vm130, 1, 0
    %v425 = vsel %vm131, 1, 0
    %vm426 = vcmp.eq.s32.totalorder %v418, 1
    %vm427 = vcmp.eq.s32.totalorder %v419, 1
    %vm428 = vcmp.eq.s32.totalorder %v420, 1
    %vm429 = vcmp.eq.s32.totalorder %v421, 1
    %vm430 = vcmp.eq.s32.totalorder %v422, 1
    %vm431 = vcmp.eq.s32.totalorder %v423, 1
    %vm432 = vcmp.eq.s32.totalorder %v424, 1
    %vm433 = vcmp.eq.s32.totalorder %v425, 1
    %v434 = vsel %vm426, %v416, 0.0
    %v435 = vsel %vm427, %v415, 0.0
    %v436 = vsel %vm428, %v414, 0.0
    %v437 = vsel %vm429, %v413, 0.0
    %v438 = vsel %vm430, %v412, 0.0
    %v439 = vsel %vm431, %v411, 0.0
    %v440 = vsel %vm432, %v410, 0.0
    %v441 = vsel %vm433, %v417, 0.0
    %442 = vrot.lane.b32.xlu0 %v336, 16
    %v443 = vpop.permute.xlu0 %442
    %444 = vrot.lane.b32.xlu0 %v337, 16
    %v445 = vpop.permute.xlu0 %444
    %446 = vrot.lane.b32.xlu0 %v338, 16
    %v447 = vpop.permute.xlu0 %446
    %448 = vrot.lane.b32.xlu0 %v339, 16
    %v449 = vpop.permute.xlu0 %448
    %450 = vrot.lane.b32.xlu0 %v340, 16
    %v451 = vpop.permute.xlu0 %450
    %452 = vrot.lane.b32.xlu0 %v341, 16
    %v453 = vpop.permute.xlu0 %452
    %454 = vrot.lane.b32.xlu0 %v342, 16
    %v455 = vpop.permute.xlu0 %454
    %456 = vrot.lane.b32.xlu0 %v343, 16
    %v457 = vpop.permute.xlu0 %456
    %v458 = vsel %vm360, %v455, %v457
    %v459 = vsel %vm360, %v453, %v455
    %v460 = vsel %vm360, %v451, %v453
    %v461 = vsel %vm360, %v449, %v451
    %v462 = vsel %vm360, %v447, %v449
    %v463 = vsel %vm360, %v445, %v447
    %v464 = vsel %vm360, %v443, %v445
    %v465 = vsel %vm360, %v457, %v443
    %v466 = vsel %vm377, %v465, 0.0
    %v467 = vsel %vm378, %v464, 0.0
    %v468 = vsel %vm379, %v463, 0.0
    %v469 = vsel %vm380, %v462, 0.0
    %v470 = vsel %vm381, %v461, 0.0
    %v471 = vsel %vm382, %v460, 0.0
    %v472 = vsel %vm383, %v459, 0.0
    %v473 = vsel %vm384, %v458, 0.0
    %474 = vrot.lane.b32.xlu0 %v336, 112
    %v475 = vpop.permute.xlu0 %474
    %476 = vrot.lane.b32.xlu0 %v337, 112
    %v477 = vpop.permute.xlu0 %476
    %478 = vrot.lane.b32.xlu0 %v338, 112
    %v479 = vpop.permute.xlu0 %478
    %480 = vrot.lane.b32.xlu0 %v339, 112
    %v481 = vpop.permute.xlu0 %480
    %482 = vrot.lane.b32.xlu0 %v340, 112
    %v483 = vpop.permute.xlu0 %482
    %484 = vrot.lane.b32.xlu0 %v341, 112
    %v485 = vpop.permute.xlu0 %484
    %486 = vrot.lane.b32.xlu0 %v342, 112
    %v487 = vpop.permute.xlu0 %486
    %488 = vrot.lane.b32.xlu0 %v343, 112
    %v489 = vpop.permute.xlu0 %488
    %v490 = vsel %vm409, %v487, %v489
    %v491 = vsel %vm409, %v485, %v487
    %v492 = vsel %vm409, %v483, %v485
    %v493 = vsel %vm409, %v481, %v483
    %v494 = vsel %vm409, %v479, %v481
    %v495 = vsel %vm409, %v477, %v479
    %v496 = vsel %vm409, %v475, %v477
    %v497 = vsel %vm409, %v489, %v475
    %v498 = vsel %vm426, %v496, 0.0
    %v499 = vsel %vm427, %v495, 0.0
    %v500 = vsel %vm428, %v494, 0.0
    %v501 = vsel %vm429, %v493, 0.0
    %v502 = vsel %vm430, %v492, 0.0
    %v503 = vsel %vm431, %v491, 0.0
    %v504 = vsel %vm432, %v490, 0.0
    %v505 = vsel %vm433, %v497, 0.0
    %v506 = vmul.f32 %v274, 2.0
    %v507 = vmul.f32 %v275, 2.0
    %v508 = vmul.f32 %v276, 2.0
    %v509 = vmul.f32 %v277, 2.0
    %v510 = vmul.f32 %v278, 2.0
    %v511 = vmul.f32 %v279, 2.0
    %v512 = vmul.f32 %v280, 2.0
    %v513 = vmul.f32 %v281, 2.0
    %v514 = vadd.f32 %v385, %v506
    %v515 = vadd.f32 %v386, %v507
    %v516 = vadd.f32 %v387, %v508
    %v517 = vadd.f32 %v388, %v509
    %v518 = vadd.f32 %v389, %v510
    %v519 = vadd.f32 %v390, %v511
    %v520 = vadd.f32 %v391, %v512
    %v521 = vadd.f32 %v392, %v513
    %v522 = vadd.f32 %v514, %v434
    %v523 = vadd.f32 %v515, %v435
    %v524 = vadd.f32 %v516, %v436
    %v525 = vadd.f32 %v517, %v437
    %v526 = vadd.f32 %v518, %v438
    %v527 = vadd.f32 %v519, %v439
    %v528 = vadd.f32 %v520, %v440
    %v529 = vadd.f32 %v521, %v441
    %v530 = vsub.f32 %v498, %v466
    %v531 = vsub.f32 %v499, %v467
    %v532 = vsub.f32 %v500, %v468
    %v533 = vsub.f32 %v501, %v469
    %v534 = vsub.f32 %v502, %v470
    %v535 = vsub.f32 %v503, %v471
    %v536 = vsub.f32 %v504, %v472
    %v537 = vsub.f32 %v505, %v473
    %s538 = sld [smem:[#allocation7]]
    %v539 = vstv %s538
    %v540 = vmul.f32 %v539, %v522
    %v541 = vmul.f32 %v539, %v523
    %s542 = sld [smem:[#allocation8]]
    %v543 = vstv %s542
    %v544 = vmul.f32 %v543, %v530
    %v545 = vmul.f32 %v543, %v531
    %v546 = vadd.f32 %v540, %v544
    %v547 = vadd.f32 %v541, %v545
    %s548 = sld [smem:[#allocation7 + $0x1]]
    %v549 = vstv %s548
    %v550 = vmul.f32 %v549, %v524
    %v551 = vmul.f32 %v549, %v525
    %s552 = sld [smem:[#allocation8 + $0x1]]
    %v553 = vstv %s552
    %v554 = vmul.f32 %v553, %v532
    %v555 = vmul.f32 %v553, %v533
    %v556 = vadd.f32 %v550, %v554
    %v557 = vadd.f32 %v551, %v555
    %v558 = vadd.f32 %v546, %v556
    %v559 = vadd.f32 %v547, %v557
    %s560 = sld [smem:[#allocation7 + $0x2]]
    %v561 = vstv %s560
    %v562 = vmul.f32 %v561, %v526
    %v563 = vmul.f32 %v561, %v527
    %s564 = sld [smem:[#allocation8 + $0x2]]
    %v565 = vstv %s564
    %v566 = vmul.f32 %v565, %v534
    %v567 = vmul.f32 %v565, %v535
    %v568 = vadd.f32 %v562, %v566
    %v569 = vadd.f32 %v563, %v567
    %v570 = vadd.f32 %v558, %v568
    %v571 = vadd.f32 %v559, %v569
    %s572 = sld [smem:[#allocation7 + $0x3]]
    %v573 = vstv %s572
    %v574 = vmul.f32 %v573, %v528
    %v575 = vmul.f32 %v573, %v529
    %s576 = sld [smem:[#allocation8 + $0x3]]
    %v577 = vstv %s576
    %v578 = vmul.f32 %v577, %v536
    %v579 = vmul.f32 %v577, %v537
    %v580 = vadd.f32 %v574, %v578
    %v581 = vadd.f32 %v575, %v579
    %v582 = vadd.f32 %v570, %v580
    %v583 = vadd.f32 %v571, %v581
    %s584 = sld [smem:[#allocation9]]
    %v585 = vstv %s584
    %v586 = vadd.f32 %v582, %v585
    %v587 = vadd.f32 %v583, %v585
    %v588 = vmax.f32 %v586, 0.0
    %v589 = vmax.f32 %v587, 0.0
    %v592 = vcombine.low %v588, %v589
    %v594 = vunpack.c.l.s4 1983009808
    %v595 = vunpack.c.0.s8 %v594
    %v596 = vlaneseq
    %v597 = vshrl.u32 %v596, 7
    %v598 = vsub.s32 %v595, %v597
    %v599 = vrot.slane %v592, %v598
    %601 = vst [vmem:[#allocation11] sm:$0xf] %v599
    %s602 = sld [smem:[#allocation7 + $0x80]]
    %v603 = vstv %s602
    %v604 = vmul.f32 %v603, %v522
    %v605 = vmul.f32 %v603, %v523
    %s606 = sld [smem:[#allocation8 + $0x80]]
    %v607 = vstv %s606
    %v608 = vmul.f32 %v607, %v530
    %v609 = vmul.f32 %v607, %v531
    %v610 = vadd.f32 %v604, %v608
    %v611 = vadd.f32 %v605, %v609
    %s612 = sld [smem:[#allocation7 + $0x81]]
    %v613 = vstv %s612
    %v614 = vmul.f32 %v613, %v524
    %v615 = vmul.f32 %v613, %v525
    %s616 = sld [smem:[#allocation8 + $0x81]]
    %v617 = vstv %s616
    %v618 = vmul.f32 %v617, %v532
    %v619 = vmul.f32 %v617, %v533
    %v620 = vadd.f32 %v614, %v618
    %v621 = vadd.f32 %v615, %v619
    %v622 = vadd.f32 %v610, %v620
    %v623 = vadd.f32 %v611, %v621
    %s624 = sld [smem:[#allocation7 + $0x82]]
    %v625 = vstv %s624
    %v626 = vmul.f32 %v625, %v526
    %v627 = vmul.f32 %v625, %v527
    %s628 = sld [smem:[#allocation8 + $0x82]]
    %v629 = vstv %s628
    %v630 = vmul.f32 %v629, %v534
    %v631 = vmul.f32 %v629, %v535
    %v632 = vadd.f32 %v626, %v630
    %v633 = vadd.f32 %v627, %v631
    %v634 = vadd.f32 %v622, %v632
    %v635 = vadd.f32 %v623, %v633
    %s636 = sld [smem:[#allocation7 + $0x83]]
    %v637 = vstv %s636
    %v638 = vmul.f32 %v637, %v528
    %v639 = vmul.f32 %v637, %v529
    %s640 = sld [smem:[#allocation8 + $0x83]]
    %v641 = vstv %s640
    %v642 = vmul.f32 %v641, %v536
    %v643 = vmul.f32 %v641, %v537
    %v644 = vadd.f32 %v638, %v642
    %v645 = vadd.f32 %v639, %v643
    %v646 = vadd.f32 %v634, %v644
    %v647 = vadd.f32 %v635, %v645
    %s648 = sld [smem:[#allocation9 + $0x1]]
    %v649 = vstv %s648
    %v650 = vadd.f32 %v646, %v649
    %v651 = vadd.f32 %v647, %v649
    %v652 = vmax.f32 %v650, 0.0
    %v653 = vmax.f32 %v651, 0.0
    %v656 = vcombine.low %v652, %v653
    %v658 = vunpack.c.l.s4 1983009808
    %v659 = vunpack.c.0.s8 %v658
    %v660 = vlaneseq
    %v661 = vshrl.u32 %v660, 7
    %v662 = vsub.s32 %v659, %v661
    %v663 = vrot.slane %v656, %v662
    %665 = vst [vmem:[#allocation11 + $0x4] sm:$0xf] %v663
    %s666 = sld [smem:[#allocation7 + $0x100]]
    %v667 = vstv %s666
    %v668 = vmul.f32 %v667, %v522
    %v669 = vmul.f32 %v667, %v523
    %s670 = sld [smem:[#allocation8 + $0x100]]
    %v671 = vstv %s670
    %v672 = vmul.f32 %v671, %v530
    %v673 = vmul.f32 %v671, %v531
    %v674 = vadd.f32 %v668, %v672
    %v675 = vadd.f32 %v669, %v673
    %s676 = sld [smem:[#allocation7 + $0x101]]
    %v677 = vstv %s676
    %v678 = vmul.f32 %v677, %v524
    %v679 = vmul.f32 %v677, %v525
    %s680 = sld [smem:[#allocation8 + $0x101]]
    %v681 = vstv %s680
    %v682 = vmul.f32 %v681, %v532
    %v683 = vmul.f32 %v681, %v533
    %v684 = vadd.f32 %v678, %v682
    %v685 = vadd.f32 %v679, %v683
    %v686 = vadd.f32 %v674, %v684
    %v687 = vadd.f32 %v675, %v685
    %s688 = sld [smem:[#allocation7 + $0x102]]
    %v689 = vstv %s688
    %v690 = vmul.f32 %v689, %v526
    %v691 = vmul.f32 %v689, %v527
    %s692 = sld [smem:[#allocation8 + $0x102]]
    %v693 = vstv %s692
    %v694 = vmul.f32 %v693, %v534
    %v695 = vmul.f32 %v693, %v535
    %v696 = vadd.f32 %v690, %v694
    %v697 = vadd.f32 %v691, %v695
    %v698 = vadd.f32 %v686, %v696
    %v699 = vadd.f32 %v687, %v697
    %s700 = sld [smem:[#allocation7 + $0x103]]
    %v701 = vstv %s700
    %v702 = vmul.f32 %v701, %v528
    %v703 = vmul.f32 %v701, %v529
    %s704 = sld [smem:[#allocation8 + $0x103]]
    %v705 = vstv %s704
    %v706 = vmul.f32 %v705, %v536
    %v707 = vmul.f32 %v705, %v537
    %v708 = vadd.f32 %v702, %v706
    %v709 = vadd.f32 %v703, %v707
    %v710 = vadd.f32 %v698, %v708
    %v711 = vadd.f32 %v699, %v709
    %s712 = sld [smem:[#allocation9 + $0x2]]
    %v713 = vstv %s712
    %v714 = vadd.f32 %v710, %v713
    %v715 = vadd.f32 %v711, %v713
    %v716 = vmax.f32 %v714, 0.0
    %v717 = vmax.f32 %v715, 0.0
    %v720 = vcombine.low %v716, %v717
    %v722 = vunpack.c.l.s4 1983009808
    %v723 = vunpack.c.0.s8 %v722
    %v724 = vlaneseq
    %v725 = vshrl.u32 %v724, 7
    %v726 = vsub.s32 %v723, %v725
    %v727 = vrot.slane %v720, %v726
    %729 = vst [vmem:[#allocation11 + $0x8] sm:$0xf] %v727
    %s730 = sld [smem:[#allocation7 + $0x180]]
    %v731 = vstv %s730
    %v732 = vmul.f32 %v731, %v522
    %v733 = vmul.f32 %v731, %v523
    %s734 = sld [smem:[#allocation8 + $0x180]]
    %v735 = vstv %s734
    %v736 = vmul.f32 %v735, %v530
    %v737 = vmul.f32 %v735, %v531
    %v738 = vadd.f32 %v732, %v736
    %v739 = vadd.f32 %v733, %v737
    %s740 = sld [smem:[#allocation7 + $0x181]]
    %v741 = vstv %s740
    %v742 = vmul.f32 %v741, %v524
    %v743 = vmul.f32 %v741, %v525
    %s744 = sld [smem:[#allocation8 + $0x181]]
    %v745 = vstv %s744
    %v746 = vmul.f32 %v745, %v532
    %v747 = vmul.f32 %v745, %v533
    %v748 = vadd.f32 %v742, %v746
    %v749 = vadd.f32 %v743, %v747
    %v750 = vadd.f32 %v738, %v748
    %v751 = vadd.f32 %v739, %v749
    %s752 = sld [smem:[#allocation7 + $0x182]]
    %v753 = vstv %s752
    %v754 = vmul.f32 %v753, %v526
    %v755 = vmul.f32 %v753, %v527
    %s756 = sld [smem:[#allocation8 + $0x182]]
    %v757 = vstv %s756
    %v758 = vmul.f32 %v757, %v534
    %v759 = vmul.f32 %v757, %v535
    %v760 = vadd.f32 %v754, %v758
    %v761 = vadd.f32 %v755, %v759
    %v762 = vadd.f32 %v750, %v760
    %v763 = vadd.f32 %v751, %v761
    %s764 = sld [smem:[#allocation7 + $0x183]]
    %v765 = vstv %s764
    %v766 = vmul.f32 %v765, %v528
    %v767 = vmul.f32 %v765, %v529
    %s768 = sld [smem:[#allocation8 + $0x183]]
    %v769 = vstv %s768
    %v770 = vmul.f32 %v769, %v536
    %v771 = vmul.f32 %v769, %v537
    %v772 = vadd.f32 %v766, %v770
    %v773 = vadd.f32 %v767, %v771
    %v774 = vadd.f32 %v762, %v772
    %v775 = vadd.f32 %v763, %v773
    %s776 = sld [smem:[#allocation9 + $0x3]]
    %v777 = vstv %s776
    %v778 = vadd.f32 %v774, %v777
    %v779 = vadd.f32 %v775, %v777
    %v780 = vmax.f32 %v778, 0.0
    %v781 = vmax.f32 %v779, 0.0
    %v784 = vcombine.low %v780, %v781
    %v786 = vunpack.c.l.s4 1983009808
    %v787 = vunpack.c.0.s8 %v786
    %v788 = vlaneseq
    %v789 = vshrl.u32 %v788, 7
    %v790 = vsub.s32 %v787, %v789
    %v791 = vrot.slane %v784, %v790
    %793 = vst [vmem:[#allocation11 + $0xc] sm:$0xf] %v791
    // Predicated region
    $region34: #{tpu_custom_call.1} parent=1 // pred_check
      _
    $region35: #{tpu_custom_call.1} parent=1 // pred_check_branch
      %795 = sbr.rel (0) target = $region37
    $region36: #{tpu_custom_call.1} parent=1 // pred_region
      %s797 = ssub.s32 256, 256
      %798 = vsyncadd [#allocation4], %s797
      %s800 = sshll.u32 [#allocation11], 4
      %s801 = int_to_ptr.vmem [resolvable:$true] %s800
      %803 = dma.vmem_to_hbm [thread:$0]  %s801, 256, %s4, [#allocation4]
    $region37: #{tpu_custom_call.1} parent=1 // pred_fallthru
      _
    // Predicated region
    $region38: #{tpu_custom_call.1} parent=1 // pred_check
      _
    $region39: #{tpu_custom_call.1} parent=1 // pred_check_branch
      %805 = sbr.rel (0) target = $region41
    $region40: #{tpu_custom_call.1} parent=1 // pred_region
      %806 = dma.done [#allocation4], 256
    $region41: #{tpu_custom_call.1} parent=1 // pred_fallthru
      _
    %807 = vsyncpa [#allocation3], 1
    %808 = vsyncpa [#allocation4], 1
    %809 = vsyncpa [#allocation5], 1
    %810 = vsyncpa [#allocation6], 1
    %811 = vsyncpa [#allocation10], 1

</llo_original>
